<compile_context>
chip_gen: v7x
topology: tpu7x:2x2x1
jax: 0.10.0
libtpu: 0.0.40
codegen_flags: <defaults>
</compile_context>

<pallas_src>
import math

import jax
import jax.numpy as jnp
from jax import lax
from jax.experimental import pallas as pl
from jax.experimental.pallas import tpu as pltpu


def _make_policy_kernel(in_pad, hidden, out_dims):
    r1 = in_pad                # end of W1 rows
    r2 = in_pad + hidden       # end of W2 rows
    r3 = in_pad + 2 * hidden   # end of fused-head rows

    def kernel(x_ref, wp_ref, bp_ref, out_ref):
        # biases: (3, hidden) fp32, one load then cheap sublane slices
        bp = bp_ref[...]

        x = x_ref[...].astype(jnp.bfloat16)

        # layer 1: relu(x @ W1 + b1)
        h1 = jnp.dot(x, wp_ref[0:r1, :],
                     preferred_element_type=jnp.float32) + bp[0:1, :]
        h1 = jnp.maximum(h1, 0.0)

        # layer 2: relu(h1 @ W2 + b2)
        h2 = jnp.dot(h1.astype(jnp.bfloat16), wp_ref[r1:r2, :],
                     preferred_element_type=jnp.float32) + bp[1:2, :]
        h2 = jnp.maximum(h2, 0.0)

        # fused heads: z[:, :out_dims] -> mu logits, z[:, out_dims:2*out_dims] -> std logits
        z = jnp.dot(h2.astype(jnp.bfloat16), wp_ref[r2:r3, :],
                    preferred_element_type=jnp.float32) + bp[2:3, :]

        mu = jnp.tanh(z)
        # softplus with threshold=20 (matches F.softplus), numerically stable
        sp = jnp.where(z > 20.0, z, jnp.log1p(jnp.exp(jnp.minimum(z, 20.0)))) + 0.001

        col = lax.broadcasted_iota(jnp.int32, z.shape, 1)
        out_ref[...] = jnp.where(col < out_dims, mu, sp)

    return kernel


def pack_params(raw, in_features, out_dims, hidden):
    """Pack raw (PyTorch-equivalent) params into the kernel's two operands.

    raw weights are stored pre-transposed as [in, out]; biases as [out]."""
    in_pad = ((in_features + 15) // 16) * 16  # bf16 sublane-tile alignment (16)
    assert 2 * out_dims <= hidden

    # bf16 weight slab: rows = [W1 (padded to in_pad) | W2 | fused heads (padded to hidden)]
    w1_p = jnp.zeros((in_pad, hidden), jnp.float32).at[:in_features, :].set(raw["w1"])
    w_heads = jnp.concatenate([raw["wmu"], raw["wstd"]], axis=1)          # (hidden, 2*out)
    wh_p = jnp.zeros((hidden, hidden), jnp.float32).at[:, :2 * out_dims].set(w_heads)
    w_packed = jnp.concatenate([w1_p, raw["w2"], wh_p], axis=0).astype(jnp.bfloat16)

    # fp32 bias slab: (3, hidden)
    b_heads = jnp.concatenate([raw["bmu"], raw["bstd"]])                  # (2*out,)
    bh_p = jnp.zeros((hidden,), jnp.float32).at[:2 * out_dims].set(b_heads)
    b_packed = jnp.stack([raw["b1"], raw["b2"], bh_p], axis=0)

    return {"w": w_packed, "b": b_packed,
            "in_features": in_features, "in_pad": in_pad,
            "hidden": hidden, "out_dims": out_dims}


def gradient_policy_forward(x, packed):
    """x: [B, in_features] float32. packed: output of pack_params. Returns (mu, std)."""
    B = x.shape[0]
    in_f = packed["in_features"]
    in_pad = packed["in_pad"]
    hidden = packed["hidden"]
    out_dims = packed["out_dims"]

    # pad observation features to the bf16-tile-aligned contraction width
    x_p = jnp.zeros((B, in_pad), jnp.float32).at[:, :in_f].set(x.astype(jnp.float32))

    cost = pl.CostEstimate(
        flops=2 * B * (in_pad * hidden + hidden * hidden + hidden * hidden)
              + 6 * B * hidden,
        transcendentals=2 * B * hidden,
        bytes_accessed=B * in_pad * 4
                       + (in_pad + 2 * hidden) * hidden * 2
                       + 3 * hidden * 4
                       + B * hidden * 4,
    )

    out = pl.pallas_call(
        _make_policy_kernel(in_pad, hidden, out_dims),
        out_shape=jax.ShapeDtypeStruct((B, hidden), jnp.float32),
        in_specs=[
            pl.BlockSpec(memory_space=pltpu.MemorySpace.VMEM),  # x (padded)
            pl.BlockSpec(memory_space=pltpu.MemorySpace.VMEM),  # packed weights (bf16)
            pl.BlockSpec(memory_space=pltpu.MemorySpace.VMEM),  # packed biases (fp32)
        ],
        out_specs=pl.BlockSpec(memory_space=pltpu.MemorySpace.VMEM),
        cost_estimate=cost,
    )(x_p, packed["w"], packed["b"])

    mu = out[:, :out_dims]
    std = out[:, out_dims:2 * out_dims]
    return mu, std


def init_raw_params(key, in_features, out_dims, hidden_size=128):
    """Deterministic init mimicking PyTorch nn.Linear default:
    U(-1/sqrt(fan_in), 1/sqrt(fan_in)). Weights stored transposed as [in, out]."""
    keys = jax.random.split(key, 8)

    def linear(kw, kb, fan_in, fan_out):
        bound = 1.0 / math.sqrt(fan_in)
        w = jax.random.uniform(kw, (fan_in, fan_out), jnp.float32, -bound, bound)
        b = jax.random.uniform(kb, (fan_out,), jnp.float32, -bound, bound)
        return w, b

    w1, b1 = linear(keys[0], keys[1], in_features, hidden_size)
    w2, b2 = linear(keys[2], keys[3], hidden_size, hidden_size)
    wmu, bmu = linear(keys[4], keys[5], hidden_size, out_dims)
    wstd, bstd = linear(keys[6], keys[7], hidden_size, out_dims)
    return {"w1": w1, "b1": b1, "w2": w2, "b2": b2,
            "wmu": wmu, "bmu": bmu, "wstd": wstd, "bstd": bstd}


def _reference_forward(x, raw):
    """Pure-JAX fp32 reference for sanity checking."""
    h1 = jnp.maximum(x @ raw["w1"] + raw["b1"], 0.0)
    h2 = jnp.maximum(h1 @ raw["w2"] + raw["b2"], 0.0)
    mu = jnp.tanh(h2 @ raw["wmu"] + raw["bmu"])
    z = h2 @ raw["wstd"] + raw["bstd"]
    std = jnp.where(z > 20.0, z, jnp.log1p(jnp.exp(jnp.minimum(z, 20.0)))) + 0.001
    return mu, std


if __name__ == "__main__":
    # LunarLanderContinuous-like sizes: obs dim 8, action dim 2, hidden 128.
    B, IN_FEATURES, OUT_DIMS, HIDDEN = 8, 8, 2, 128

    key = jax.random.PRNGKey(0)
    k_x, k_p = jax.random.split(key)
    x = jax.random.normal(k_x, (B, IN_FEATURES), dtype=jnp.float32)

    raw = init_raw_params(k_p, IN_FEATURES, OUT_DIMS, HIDDEN)
    packed = pack_params(raw, IN_FEATURES, OUT_DIMS, HIDDEN)

    mu, std = gradient_policy_forward(x, packed)
    jax.block_until_ready((mu, std))

    # sanity: shapes, std positivity, tanh bound, and closeness to fp32 reference
    assert mu.shape == (B, OUT_DIMS) and std.shape == (B, OUT_DIMS)
    assert bool(jnp.all(std > 0.0))
    assert bool(jnp.all(jnp.abs(mu) <= 1.0))

    mu_ref, std_ref = _reference_forward(x, raw)
    assert bool(jnp.all(jnp.abs(mu - mu_ref) < 5e-2))   # bf16 matmul inputs, fp32 accum
    assert bool(jnp.all(jnp.abs(std - std_ref) < 5e-2))

    print("KERNEL_OK")
</pallas_src>

<mosaic_0001>
module attributes {stable_mosaic.version = 11 : i64} {
  func.func @kernel(%arg0: memref<8x16xf32, #tpu.memory_space<vmem>>, %arg1: memref<272x128xbf16, #tpu.memory_space<vmem>>, %arg2: memref<3x128xf32, #tpu.memory_space<vmem>>, %arg3: memref<8x128xf32, #tpu.memory_space<vmem>>) attributes {dimension_semantics = [], scalar_prefetch = 0 : i64, scratch_operands = 0 : i64, tpu.core_type = #tpu.core_type<tc>} {
    %c0 = arith.constant 0 : index
    %c0_0 = arith.constant 0 : index
    %0 = vector.load %arg2[%c0, %c0_0] : memref<3x128xf32, #tpu.memory_space<vmem>>, vector<3x128xf32>
    %c0_1 = arith.constant 0 : index
    %c0_2 = arith.constant 0 : index
    %1 = vector.load %arg0[%c0_1, %c0_2] : memref<8x16xf32, #tpu.memory_space<vmem>>, vector<8x16xf32>
    %2 = arith.truncf %1 : vector<8x16xf32> to vector<8x16xbf16>
    %c0_3 = arith.constant 0 : index
    %c0_4 = arith.constant 0 : index
    %3 = vector.load %arg1[%c0_3, %c0_4] : memref<272x128xbf16, #tpu.memory_space<vmem>>, vector<16x128xbf16>
    %cst = arith.constant dense<0.000000e+00> : vector<8x128xf32>
    %4 = tpu.matmul %2, %3, %cst {dimension_numbers = #tpu.dot_dimension_numbers<[1], [0], [0], [1], [0, 0, 1, 1], [], []>} : vector<8x16xbf16>, vector<16x128xbf16>, vector<8x128xf32> -> vector<8x128xf32>
    %5 = vector.extract_strided_slice %0 {offsets = [0, 0], sizes = [1, 128], strides = [1, 1]} : vector<3x128xf32> to vector<1x128xf32>
    %6 = vector.broadcast %5 : vector<1x128xf32> to vector<8x128xf32>
    %7 = arith.addf %4, %6 : vector<8x128xf32>
    %cst_5 = arith.constant 0.000000e+00 : f32
    %8 = vector.broadcast %cst_5 : f32 to vector<8x128xf32>
    %9 = arith.maximumf %7, %8 : vector<8x128xf32>
    %10 = arith.truncf %9 : vector<8x128xf32> to vector<8x128xbf16>
    %c16 = arith.constant 16 : index
    %c0_6 = arith.constant 0 : index
    %11 = vector.load %arg1[%c16, %c0_6] : memref<272x128xbf16, #tpu.memory_space<vmem>>, vector<128x128xbf16>
    %cst_7 = arith.constant dense<0.000000e+00> : vector<8x128xf32>
    %12 = tpu.matmul %10, %11, %cst_7 {dimension_numbers = #tpu.dot_dimension_numbers<[1], [0], [0], [1], [0, 0, 1, 1], [], []>} : vector<8x128xbf16>, vector<128x128xbf16>, vector<8x128xf32> -> vector<8x128xf32>
    %13 = vector.extract_strided_slice %0 {offsets = [1, 0], sizes = [1, 128], strides = [1, 1]} : vector<3x128xf32> to vector<1x128xf32>
    %14 = vector.broadcast %13 : vector<1x128xf32> to vector<8x128xf32>
    %15 = arith.addf %12, %14 : vector<8x128xf32>
    %cst_8 = arith.constant 0.000000e+00 : f32
    %16 = vector.broadcast %cst_8 : f32 to vector<8x128xf32>
    %17 = arith.maximumf %15, %16 : vector<8x128xf32>
    %18 = arith.truncf %17 : vector<8x128xf32> to vector<8x128xbf16>
    %c144 = arith.constant 144 : index
    %c0_9 = arith.constant 0 : index
    %19 = vector.load %arg1[%c144, %c0_9] : memref<272x128xbf16, #tpu.memory_space<vmem>>, vector<128x128xbf16>
    %cst_10 = arith.constant dense<0.000000e+00> : vector<8x128xf32>
    %20 = tpu.matmul %18, %19, %cst_10 {dimension_numbers = #tpu.dot_dimension_numbers<[1], [0], [0], [1], [0, 0, 1, 1], [], []>} : vector<8x128xbf16>, vector<128x128xbf16>, vector<8x128xf32> -> vector<8x128xf32>
    %21 = vector.extract_strided_slice %0 {offsets = [2, 0], sizes = [1, 128], strides = [1, 1]} : vector<3x128xf32> to vector<1x128xf32>
    %22 = vector.broadcast %21 : vector<1x128xf32> to vector<8x128xf32>
    %23 = arith.addf %20, %22 : vector<8x128xf32>
    %24 = math.tanh %23 : vector<8x128xf32>
    %cst_11 = arith.constant 2.000000e+01 : f32
    %25 = vector.broadcast %cst_11 : f32 to vector<8x128xf32>
    %26 = arith.cmpf ogt, %23, %25 : vector<8x128xf32>
    %cst_12 = arith.constant 2.000000e+01 : f32
    %27 = vector.broadcast %cst_12 : f32 to vector<8x128xf32>
    %28 = arith.minimumf %23, %27 : vector<8x128xf32>
    %29 = math.exp %28 : vector<8x128xf32>
    %30 = math.log1p %29 : vector<8x128xf32>
    %31 = arith.select %26, %23, %30 : vector<8x128xi1>, vector<8x128xf32>
    %cst_13 = arith.constant 1.000000e-03 : f32
    %32 = vector.broadcast %cst_13 : f32 to vector<8x128xf32>
    %33 = arith.addf %31, %32 : vector<8x128xf32>
    %34 = tpu.iota {dimensions = array<i32: 1>} : vector<8x128xi32>
    %c2_i32 = arith.constant 2 : i32
    %35 = vector.broadcast %c2_i32 : i32 to vector<8x128xi32>
    %36 = arith.cmpi slt, %34, %35 : vector<8x128xi32>
    %37 = arith.select %36, %24, %33 : vector<8x128xi1>, vector<8x128xf32>
    %c0_14 = arith.constant 0 : index
    %c0_15 = arith.constant 0 : index
    %38 = vector.load %arg3[%c0_14, %c0_15] : memref<8x128xf32, #tpu.memory_space<vmem>>, vector<8x128xf32>
    tpu.vector_store %arg3[%c0_14, %c0_15], %37 {strides = array<i32>} : memref<8x128xf32, #tpu.memory_space<vmem>>, vector<8x128xf32>,
    return
  }
}

</mosaic_0001>

<llo_original>
// kernel: tpu_custom_call.1
$region0: #{tpu_custom_call.1}
  #allocation0 [shape = 'u32[]', space=smem, size = 0x4, offset = 0x4, fixed_abs, tag = 'smem constant byte address 0x4 - core index']
  #allocation1 [shape = 'u32[144,128]{1,0:T(1,128)}', space=vmem, size = 0x12000, scoped, tag = 'internal scratch']
  %s0 = inlined_call_operand.hbm [shape: f32[8,16], index: 0, kind: input, shape index: {}]
  %s1 = inlined_call_operand.hbm [shape: bf16[272,128], index: 1, kind: input, shape index: {}]
  %s2 = inlined_call_operand.vmem [shape: f32[3,128], index: 2, kind: input, shape index: {}]
  %s3 = inlined_call_operand.hbm [shape: f32[8,128], index: 3, kind: output, shape index: {}]
  %s4 = sld [smem:[#allocation0]]
  $region30: #{tpu_custom_call.1} parent=0
    _
  %s6 = ssub.s32 1, %s4
  %s7 = scalar_select 0, %s6, %s4
  $region1: #{tpu_custom_call.1} parent=0
    #allocation2 [shape = 'u8[4096]{0}', space=vmem, size = 0x1000, scoped, tag = 'input window, operand 0, single buffered']
    #allocation3 [shape = 's32[1]{0}', space=sflag, size = 0x4, scoped, tag = 'scoped memory for tpu_custom_call.1']
    #allocation4 [shape = 's32[1]{0}', space=sflag, size = 0x4, scoped, tag = 'scoped memory for tpu_custom_call.1']
    #allocation5 [shape = 'u8[69632]{0}', space=vmem, size = 0x11000, scoped, tag = 'input window, operand 1, single buffered']
    #allocation6 [shape = 's32[1]{0}', space=sflag, size = 0x4, scoped, tag = 'scoped memory for tpu_custom_call.1']
    #allocation7 [shape = 'u8[4096]{0}', space=vmem, size = 0x1000, scoped, tag = 'output window, operand 0, single buffered']
    %8 = vsyncpa [#allocation3], 0
    %9 = vsyncpa [#allocation6], 0
    %10 = vsyncpa [#allocation4], 0
    // Predicated region
    $region2: #{tpu_custom_call.1} parent=1 // pred_check
      _
    $region3: #{tpu_custom_call.1} parent=1 // pred_check_branch
      %12 = sbr.rel (0) target = $region5
    $region4: #{tpu_custom_call.1} parent=1 // pred_region
      %s14 = ssub.s32 128, 128
      %15 = vsyncadd [#allocation3], %s14
      %s17 = sshll.u32 [#allocation2], 4
      %s18 = int_to_ptr.vmem [resolvable:$true] %s17
      %20 = dma.hbm_to_vmem [thread:$0]  %s0, 128, %s18, [#allocation3]
    $region5: #{tpu_custom_call.1} parent=1 // pred_fallthru
      _
    // Predicated region
    $region6: #{tpu_custom_call.1} parent=1 // pred_check
      _
    $region7: #{tpu_custom_call.1} parent=1 // pred_check_branch
      %22 = sbr.rel (0) target = $region9
    $region8: #{tpu_custom_call.1} parent=1 // pred_region
      %s24 = ssub.s32 2176, 2176
      %25 = vsyncadd [#allocation6], %s24
      %s26 = sshll.u32 [#allocation5], 4
      %s27 = int_to_ptr.vmem [resolvable:$true] %s26
      %32 = dma.hbm_to_vmem [thread:$0]  %s1, 2176, %s27, [#allocation6], 64, 64, 4
    $region9: #{tpu_custom_call.1} parent=1 // pred_fallthru
      _
    // Predicated region
    $region10: #{tpu_custom_call.1} parent=1 // pred_check
      _
    $region11: #{tpu_custom_call.1} parent=1 // pred_check_branch
      %34 = sbr.rel (0) target = $region13
    $region12: #{tpu_custom_call.1} parent=1 // pred_region
      _
    $region13: #{tpu_custom_call.1} parent=1 // pred_fallthru
      _
    // Predicated region
    $region14: #{tpu_custom_call.1} parent=1 // pred_check
      _
    $region15: #{tpu_custom_call.1} parent=1 // pred_check_branch
      %36 = sbr.rel (0) target = $region17
    $region16: #{tpu_custom_call.1} parent=1 // pred_region
      %37 = dma.done [#allocation3], 128
    $region17: #{tpu_custom_call.1} parent=1 // pred_fallthru
      _
    // Predicated region
    $region18: #{tpu_custom_call.1} parent=1 // pred_check
      _
    $region19: #{tpu_custom_call.1} parent=1 // pred_check_branch
      %39 = sbr.rel (0) target = $region21
    $region20: #{tpu_custom_call.1} parent=1 // pred_region
      %40 = dma.done [#allocation6], 2176
    $region21: #{tpu_custom_call.1} parent=1 // pred_fallthru
      _
    %v42 = vld [vmem:[%s2] sm:$0x7]
    %v43 = vld [vmem:[#allocation2] sm:$0xff]
    %v44 = vpack.c.bf16 %v43, %v43
    %v45 = vld [vmem:[#allocation5] sm:$0xf]
    %v46 = vld [vmem:[#allocation5 + $0x4] sm:$0xf]
    %v47 = vlaneseq
    %v48 = vshrl.u32 %v47, 7
    %v49 = vsub.s32 0, %v48
    %v50 = vrot.slane %v42, %v49
    %v53 = vunpack.c.l.b16 %v45
    %v54 = vunpack.c.l.b16 %v46
    %v55 = vpack.c.b16 %v54, %v53
    %vm57 = vcmask 130048
    %v59 = vsel %vm57, %v44, 0
    %61 = vmatprep.subr.bf16.mxu0 0
    %62 = vmatpush1.bf16.msra.mxu0 %v55
    %63 = vmatprep.subr.bf16.mxu0 0
    %64 = vmatpush1.bf16.msra.mxu0 0
    %65 = vmatprep.subr.bf16.mxu0 0
    %66 = vmatpush1.bf16.msra.mxu0 0
    %67 = vmatprep.subr.bf16.mxu0 0
    %68 = vmatpush1.bf16.msra.mxu0 0
    %69 = vmatprep.subr.bf16.mxu0 0
    %70 = vmatpush1.bf16.msra.mxu0 0
    %71 = vmatprep.subr.bf16.mxu0 0
    %72 = vmatpush1.bf16.msra.mxu0 0
    %73 = vmatprep.subr.bf16.mxu0 0
    %74 = vmatpush1.bf16.msra.mxu0 0
    %75 = vmatprep.subr.bf16.mxu0 0
    %76 = vmatpush1.bf16.msra.mxu0 0
    %77 = vmatprep.subr.bf16.mxu0 0
    %78 = vmatpush1.bf16.msra.mxu0 0
    %79 = vmatprep.subr.bf16.mxu0 0
    %80 = vmatpush1.bf16.msra.mxu0 0
    %81 = vmatprep.subr.bf16.mxu0 0
    %82 = vmatpush1.bf16.msra.mxu0 0
    %83 = vmatprep.subr.bf16.mxu0 0
    %84 = vmatpush1.bf16.msra.mxu0 0
    %85 = vmatprep.subr.bf16.mxu0 0
    %86 = vmatpush1.bf16.msra.mxu0 0
    %87 = vmatprep.subr.bf16.mxu0 0
    %88 = vmatpush1.bf16.msra.mxu0 0
    %89 = vmatprep.subr.bf16.mxu0 0
    %90 = vmatpush1.bf16.msra.mxu0 0
    %91 = vmatprep.subr.bf16.mxu0 0
    %92 = vmatpush1.bf16.msra.mxu0 0
    %93 = vmatprep.mubr.bf16.mxu0 0
    %94 = vmatmul.mubr.bf16.gmra.mrb[0].mxu0 %v59
    %v95 = vpop.f32.mrb[0].mxu0
    %v96 = vadd.f32 %v50, %v95
    %v97 = vpop.f32.mrb[0].mxu0
    %v98 = vpop.f32.mrb[0].mxu0
    %v99 = vpop.f32.mrb[0].mxu0
    %100 = vdwg.mxu0
    %v101 = vmax.f32 %v96, 0.0
    %v102 = vpack.c.bf16 %v101, %v101
    %v103 = vld [vmem:[#allocation5 + $0x8] sm:$0xf]
    %v104 = vld [vmem:[#allocation5 + $0xc] sm:$0xf]
    %v105 = vld [vmem:[#allocation5 + $0x10] sm:$0xf]
    %v106 = vld [vmem:[#allocation5 + $0x14] sm:$0xf]
    %v107 = vld [vmem:[#allocation5 + $0x18] sm:$0xf]
    %v108 = vld [vmem:[#allocation5 + $0x1c] sm:$0xf]
    %v109 = vld [vmem:[#allocation5 + $0x20] sm:$0xf]
    %v110 = vld [vmem:[#allocation5 + $0x24] sm:$0xf]
    %v111 = vld [vmem:[#allocation5 + $0x28] sm:$0xf]
    %v112 = vld [vmem:[#allocation5 + $0x2c] sm:$0xf]
    %v113 = vld [vmem:[#allocation5 + $0x30] sm:$0xf]
    %v114 = vld [vmem:[#allocation5 + $0x34] sm:$0xf]
    %v115 = vld [vmem:[#allocation5 + $0x38] sm:$0xf]
    %v116 = vld [vmem:[#allocation5 + $0x3c] sm:$0xf]
    %v117 = vld [vmem:[#allocation5 + $0x40] sm:$0xf]
    %v118 = vld [vmem:[#allocation5 + $0x44] sm:$0xf]
    %v119 = vlaneseq
    %v120 = vshrl.u32 %v119, 7
    %v121 = vsub.s32 1, %v120
    %v122 = vrot.slane %v42, %v121
    %v139 = vunpack.c.l.b16 %v103
    %v140 = vunpack.c.l.b16 %v104
    %v141 = vunpack.c.l.b16 %v105
    %v142 = vunpack.c.l.b16 %v106
    %v143 = vunpack.c.l.b16 %v107
    %v144 = vunpack.c.l.b16 %v108
    %v145 = vunpack.c.l.b16 %v109
    %v146 = vunpack.c.l.b16 %v110
    %v147 = vunpack.c.l.b16 %v111
    %v148 = vunpack.c.l.b16 %v112
    %v149 = vunpack.c.l.b16 %v113
    %v150 = vunpack.c.l.b16 %v114
    %v151 = vunpack.c.l.b16 %v115
    %v152 = vunpack.c.l.b16 %v116
    %v153 = vunpack.c.l.b16 %v117
    %v154 = vunpack.c.l.b16 %v118
    %v155 = vpack.c.b16 %v140, %v139
    %v156 = vpack.c.b16 %v142, %v141
    %v157 = vpack.c.b16 %v144, %v143
    %v158 = vpack.c.b16 %v146, %v145
    %v159 = vpack.c.b16 %v148, %v147
    %v160 = vpack.c.b16 %v150, %v149
    %v161 = vpack.c.b16 %v152, %v151
    %v162 = vpack.c.b16 %v154, %v153
    %171 = vmatprep.subr.bf16.mxu0 0
    %172 = vmatpush1.bf16.msra.mxu0 %v155
    %173 = vmatprep.subr.bf16.mxu0 0
    %174 = vmatpush1.bf16.msra.mxu0 %v156
    %175 = vmatprep.subr.bf16.mxu0 0
    %176 = vmatpush1.bf16.msra.mxu0 %v157
    %177 = vmatprep.subr.bf16.mxu0 0
    %178 = vmatpush1.bf16.msra.mxu0 %v158
    %179 = vmatprep.subr.bf16.mxu0 0
    %180 = vmatpush1.bf16.msra.mxu0 %v159
    %181 = vmatprep.subr.bf16.mxu0 0
    %182 = vmatpush1.bf16.msra.mxu0 %v160
    %183 = vmatprep.subr.bf16.mxu0 0
    %184 = vmatpush1.bf16.msra.mxu0 %v161
    %185 = vmatprep.subr.bf16.mxu0 0
    %186 = vmatpush1.bf16.msra.mxu0 %v162
    %187 = vmatprep.subr.bf16.mxu0 0
    %188 = vmatpush1.bf16.msra.mxu0 0
    %189 = vmatprep.subr.bf16.mxu0 0
    %190 = vmatpush1.bf16.msra.mxu0 0
    %191 = vmatprep.subr.bf16.mxu0 0
    %192 = vmatpush1.bf16.msra.mxu0 0
    %193 = vmatprep.subr.bf16.mxu0 0
    %194 = vmatpush1.bf16.msra.mxu0 0
    %195 = vmatprep.subr.bf16.mxu0 0
    %196 = vmatpush1.bf16.msra.mxu0 0
    %197 = vmatprep.subr.bf16.mxu0 0
    %198 = vmatpush1.bf16.msra.mxu0 0
    %199 = vmatprep.subr.bf16.mxu0 0
    %200 = vmatpush1.bf16.msra.mxu0 0
    %201 = vmatprep.subr.bf16.mxu0 0
    %202 = vmatpush1.bf16.msra.mxu0 0
    %203 = vmatprep.mubr.bf16.mxu0 0
    %204 = vmatmul.mubr.bf16.gmra.mrb[0].mxu0 %v102
    %v205 = vpop.f32.mrb[0].mxu0
    %v206 = vadd.f32 %v122, %v205
    %v207 = vpop.f32.mrb[0].mxu0
    %v208 = vpop.f32.mrb[0].mxu0
    %v209 = vpop.f32.mrb[0].mxu0
    %210 = vdwg.mxu0
    %v211 = vmax.f32 %v206, 0.0
    %v212 = vpack.c.bf16 %v211, %v211
    %v213 = vld [vmem:[#allocation5 + $0x48] sm:$0xf]
    %v214 = vld [vmem:[#allocation5 + $0x4c] sm:$0xf]
    %v215 = vld [vmem:[#allocation5 + $0x50] sm:$0xf]
    %v216 = vld [vmem:[#allocation5 + $0x54] sm:$0xf]
    %v217 = vld [vmem:[#allocation5 + $0x58] sm:$0xf]
    %v218 = vld [vmem:[#allocation5 + $0x5c] sm:$0xf]
    %v219 = vld [vmem:[#allocation5 + $0x60] sm:$0xf]
    %v220 = vld [vmem:[#allocation5 + $0x64] sm:$0xf]
    %v221 = vld [vmem:[#allocation5 + $0x68] sm:$0xf]
    %v222 = vld [vmem:[#allocation5 + $0x6c] sm:$0xf]
    %v223 = vld [vmem:[#allocation5 + $0x70] sm:$0xf]
    %v224 = vld [vmem:[#allocation5 + $0x74] sm:$0xf]
    %v225 = vld [vmem:[#allocation5 + $0x78] sm:$0xf]
    %v226 = vld [vmem:[#allocation5 + $0x7c] sm:$0xf]
    %v227 = vld [vmem:[#allocation5 + $0x80] sm:$0xf]
    %v228 = vld [vmem:[#allocation5 + $0x84] sm:$0xf]
    %v229 = vlaneseq
    %v230 = vshrl.u32 %v229, 7
    %v231 = vsub.s32 2, %v230
    %v232 = vrot.slane %v42, %v231
    %v249 = vunpack.c.l.b16 %v213
    %v250 = vunpack.c.l.b16 %v214
    %v251 = vunpack.c.l.b16 %v215
    %v252 = vunpack.c.l.b16 %v216
    %v253 = vunpack.c.l.b16 %v217
    %v254 = vunpack.c.l.b16 %v218
    %v255 = vunpack.c.l.b16 %v219
    %v256 = vunpack.c.l.b16 %v220
    %v257 = vunpack.c.l.b16 %v221
    %v258 = vunpack.c.l.b16 %v222
    %v259 = vunpack.c.l.b16 %v223
    %v260 = vunpack.c.l.b16 %v224
    %v261 = vunpack.c.l.b16 %v225
    %v262 = vunpack.c.l.b16 %v226
    %v263 = vunpack.c.l.b16 %v227
    %v264 = vunpack.c.l.b16 %v228
    %v265 = vpack.c.b16 %v250, %v249
    %v266 = vpack.c.b16 %v252, %v251
    %v267 = vpack.c.b16 %v254, %v253
    %v268 = vpack.c.b16 %v256, %v255
    %v269 = vpack.c.b16 %v258, %v257
    %v270 = vpack.c.b16 %v260, %v259
    %v271 = vpack.c.b16 %v262, %v261
    %v272 = vpack.c.b16 %v264, %v263
    %281 = vmatprep.subr.bf16.mxu0 0
    %282 = vmatpush1.bf16.msra.mxu0 %v265
    %283 = vmatprep.subr.bf16.mxu0 0
    %284 = vmatpush1.bf16.msra.mxu0 %v266
    %285 = vmatprep.subr.bf16.mxu0 0
    %286 = vmatpush1.bf16.msra.mxu0 %v267
    %287 = vmatprep.subr.bf16.mxu0 0
    %288 = vmatpush1.bf16.msra.mxu0 %v268
    %289 = vmatprep.subr.bf16.mxu0 0
    %290 = vmatpush1.bf16.msra.mxu0 %v269
    %291 = vmatprep.subr.bf16.mxu0 0
    %292 = vmatpush1.bf16.msra.mxu0 %v270
    %293 = vmatprep.subr.bf16.mxu0 0
    %294 = vmatpush1.bf16.msra.mxu0 %v271
    %295 = vmatprep.subr.bf16.mxu0 0
    %296 = vmatpush1.bf16.msra.mxu0 %v272
    %297 = vmatprep.subr.bf16.mxu0 0
    %298 = vmatpush1.bf16.msra.mxu0 0
    %299 = vmatprep.subr.bf16.mxu0 0
    %300 = vmatpush1.bf16.msra.mxu0 0
    %301 = vmatprep.subr.bf16.mxu0 0
    %302 = vmatpush1.bf16.msra.mxu0 0
    %303 = vmatprep.subr.bf16.mxu0 0
    %304 = vmatpush1.bf16.msra.mxu0 0
    %305 = vmatprep.subr.bf16.mxu0 0
    %306 = vmatpush1.bf16.msra.mxu0 0
    %307 = vmatprep.subr.bf16.mxu0 0
    %308 = vmatpush1.bf16.msra.mxu0 0
    %309 = vmatprep.subr.bf16.mxu0 0
    %310 = vmatpush1.bf16.msra.mxu0 0
    %311 = vmatprep.subr.bf16.mxu0 0
    %312 = vmatpush1.bf16.msra.mxu0 0
    %313 = vmatprep.mubr.bf16.mxu0 0
    %314 = vmatmul.mubr.bf16.gmra.mrb[0].mxu0 %v212
    %v315 = vpop.f32.mrb[0].mxu0
    %v316 = vadd.f32 %v232, %v315
    %v317 = vpop.f32.mrb[0].mxu0
    %v318 = vpop.f32.mrb[0].mxu0
    %v319 = vpop.f32.mrb[0].mxu0
    %320 = vdwg.mxu0
    %v321 = vtanh.pop %v316
    %vm322 = vcmp.gt.f32.partialorder %v316, 20.0
    %v323 = vmin.f32 %v316, 20.0
    %v324 = vmul.f32 %v323, 1.442695
    %v325 = vpow.pop %v324
    %v326 = vadd.f32 %v325, 1.0
    %v327 = vlog2.pop %v326
    %v328 = vmul.f32 %v327, 0.6931472
    %v329 = vmul.f32 -0.5, %v325
    %v330 = vadd.f32 %v329, 1.0
    %v331 = vmul.f32 %v330, %v325
    %v332 = vand.u32 2147483647, %v325
    %vm333 = vcmp.lt.f32.partialorder %v332, 0.0004427343
    %v334 = vsel %vm333, %v331, %v328
    %v335 = vsel %vm322, %v316, %v334
    %v336 = vadd.f32 %v335, 0.001
    %v337 = vlaneseq
    %v338 = vand.u32 %v337, 127
    %vm339 = vcmp.lt.s32.totalorder %v338, 2
    %v340 = vsel %vm339, %v321, %v336
    %341 = vst [vmem:[#allocation7] sm:$0xff] %v340
    // Predicated region
    $region22: #{tpu_custom_call.1} parent=1 // pred_check
      _
    $region23: #{tpu_custom_call.1} parent=1 // pred_check_branch
      %343 = sbr.rel (0) target = $region25
    $region24: #{tpu_custom_call.1} parent=1 // pred_region
      %s345 = ssub.s32 128, 128
      %346 = vsyncadd [#allocation4], %s345
      %s348 = sshll.u32 [#allocation7], 4
      %s349 = int_to_ptr.vmem [resolvable:$true] %s348
      %351 = dma.vmem_to_hbm [thread:$0]  %s349, 128, %s3, [#allocation4]
    $region25: #{tpu_custom_call.1} parent=1 // pred_fallthru
      _
    // Predicated region
    $region26: #{tpu_custom_call.1} parent=1 // pred_check
      _
    $region27: #{tpu_custom_call.1} parent=1 // pred_check_branch
      %353 = sbr.rel (0) target = $region29
    $region28: #{tpu_custom_call.1} parent=1 // pred_region
      %354 = dma.done [#allocation4], 128
    $region29: #{tpu_custom_call.1} parent=1 // pred_fallthru
      _
    %355 = vsyncpa [#allocation3], 1
    %356 = vsyncpa [#allocation6], 1
    %357 = vsyncpa [#allocation4], 1

</llo_original>
